<compile_context>
chip_gen: v6e
topology: v6e:2x2x1
jax: 0.10.0
libtpu: 0.0.40
codegen_flags: <defaults>
</compile_context>

<pallas_src>
import jax
import jax.numpy as jnp
from jax.experimental import pallas as pl
from jax.experimental.pallas import tpu as pltpu


def acu_kernel(x_ref,
               w1_ref, b1_ref,
               w2_ref, b2_ref,
               w345_ref, b345_ref,
               o_ref):
    cdt = w1_ref.dtype                         # compute dtype (bf16 or f32)
    # Cast x in-kernel (rides in spare VALU slots under the MXU work) instead
    # of a separate wrapper-side cast that doubles x-path HBM bytes.
    x = x_ref[...].astype(cdt)                 # (bt, D)

    # Linear(D -> 1024)           [Dropout(0.2): identity in eval mode]
    h = jnp.dot(x, w1_ref[...], preferred_element_type=jnp.float32) + b1_ref[...]
    # Linear(1024 -> 128)         [Dropout(0.2): identity in eval mode]
    h = jnp.dot(h.astype(cdt), w2_ref[...],
                preferred_element_type=jnp.float32) + b2_ref[...]
    # Fused Linear(128->64) -> [Dropout(0.1) identity] -> Linear(64->16)
    # -> Linear(16->1): eval-mode fusion to a single (128 -> 1) head.
    # Computed transposed so the result lands lane-dense: contract the last
    # dims of (8,128)-padded w345 and (bt,128) h -> (8, bt); row 0 is real,
    # rows 1..7 are zero padding (MXU-aligned M).
    yT = jax.lax.dot_general(
        w345_ref[...], h.astype(cdt),
        dimension_numbers=(((1,), (1,)), ((), ())),
        preferred_element_type=jnp.float32)                    # (8, bt)
    o_ref[...] = (yT[0:1, :] + b345_ref[0, 0]).astype(o_ref.dtype)
    # TODO(synk): training-mode dropout (stochastic masking at the marked
    # points) is not implemented; the layer-3/4/5 head fusion above is
    # eval-mode only (the w4@w5 part alone would also be valid in training).


def _round_up(a, m):
    return ((a + m - 1) // m) * m


def _vmem_cap_bytes():
    """Physical VMEM of the attached TPU (64 MiB fallback, safe on v5e..v7x)."""
    try:
        info = pltpu.get_tpu_info()
        cap = getattr(info, "vmem_capacity_bytes", None)
        if cap:
            return int(cap)
    except Exception:
        pass
    return 64 * 1024 * 1024


def _choose_batch_tiling(B, batch_tile, itemsize):
    """Pick (bt, Bp).  Lane-dense output block (1, bt) needs bt % 128 == 0
    when the grid has >1 step; with a single step bt == Bp (full extent).
    Prefers >= 2 steps for B > 128 (v7x megacore) and minimizes padding."""
    sub = max(8, 32 // itemsize)               # sublane granularity of x
    if B <= 128:
        bt = _round_up(B, sub)
        return bt, bt
    min_steps = max(2, -(-B // batch_tile))    # cdiv
    max_steps = min(-(-B // 128), min_steps + 32)
    best_bt, best_bp = None, None
    for n in range(min_steps, max_steps + 1):
        bt = _round_up(-(-B // n), 128)
        bp = _round_up(B, bt)
        if best_bp is None or bp < best_bp:    # ties keep the larger tile
            best_bt, best_bp = bt, bp
    return best_bt, best_bp


def acu_forward(x, params, *, batch_tile=512, compute_dtype=jnp.bfloat16):
    """ACUModel eval-mode forward. x: (B, input_size) -> (B, 1) f32."""
    B, D = x.shape
    f32 = jnp.float32
    hi = jax.lax.Precision.HIGHEST
    cdt = jnp.dtype(compute_dtype)

    # Eval-mode fusion of Linear(128,64)->Linear(64,16)->Linear(16,1).
    w345 = jnp.dot(jnp.dot(params["w3"], params["w4"], precision=hi),
                   params["w5"], precision=hi)                        # (128, 1)
    b345 = jnp.dot(jnp.dot(params["b3"], params["w4"], precision=hi)
                   + params["b4"], params["w5"], precision=hi) + params["b5"]
    w345_pad = jnp.zeros((8, 128), f32).at[0, :].set(w345[:, 0])      # pad M to 8

    w1 = params["w1"].astype(cdt); b1 = params["b1"].astype(f32)
    w2 = params["w2"].astype(cdt); b2 = params["b2"].astype(f32)
    w345_pad = w345_pad.astype(cdt); b345 = b345.astype(f32)

    bt, Bp = _choose_batch_tiling(B, batch_tile, x.dtype.itemsize)
    xk = x if Bp == B else jnp.pad(x, ((0, Bp - B), (0, 0)))
    grid = (Bp // bt,)

    def full_spec(shape):
        # Whole-array block, same block every grid step (fetched once).
        return pl.BlockSpec(shape, lambda i: (0,) * len(shape))

    flops = 2 * Bp * (D * 1024 + 1024 * 128 + 8 * 128)
    weight_bytes = int(sum(a.size * a.dtype.itemsize
                           for a in (w1, b1, w2, b2, w345_pad)))
    bytes_accessed = int(Bp * D * x.dtype.itemsize + weight_bytes + Bp * 4)

    # Rough VMEM need: double-buffered x/out tiles, weights (counted double-
    # buffered as a worst case even though their block index is constant),
    # plus the f32 activation temporaries.
    vmem_est = (2 * bt * D * x.dtype.itemsize + 2 * bt * 4
                + 2 * weight_bytes
                + bt * (1024 + 1024 + 128 + 128) * 4)
    # Clamp below physical VMEM (v7x has only 64 MiB per TensorCore); always
    # set it explicitly so v5e's small 16 MiB default scoped limit is lifted.
    vmem_limit = min(max(int(1.5 * vmem_est), 32 * 1024 * 1024),
                     int(0.8 * _vmem_cap_bytes()))
    # TODO(synk): for very large D, add a K grid axis over D for layer 1 so
    # bt*D + weight bytes stay inside VMEM (threshold ~2x lower on v7x).

    out = pl.pallas_call(
        acu_kernel,
        out_shape=jax.ShapeDtypeStruct((1, Bp), jnp.float32),
        grid_spec=pltpu.PrefetchScalarGridSpec(
            num_scalar_prefetch=0,
            grid=grid,
            in_specs=[
                pl.BlockSpec((bt, D), lambda i: (i, 0)),        # x batch tile
                full_spec(w1.shape), full_spec(b1.shape),
                full_spec(w2.shape), full_spec(b2.shape),
                full_spec(w345_pad.shape),
                pl.BlockSpec(memory_space=pltpu.MemorySpace.SMEM),  # (1,1) bias
            ],
            out_specs=pl.BlockSpec((1, bt), lambda i: (0, i)),  # lane-dense row
        ),
        compiler_params=pltpu.CompilerParams(
            dimension_semantics=("parallel",),
            vmem_limit_bytes=vmem_limit),
        cost_estimate=pl.CostEstimate(
            flops=flops, transcendentals=0, bytes_accessed=bytes_accessed),
    )(xk, w1, b1, w2, b2, w345_pad, b345)

    return out[0, :B][:, None]                 # (B, 1)


def init_params(key, input_size):
    """torch.nn.Linear default init: U(-1/sqrt(fan_in), +1/sqrt(fan_in))."""
    dims = [(input_size, 1024), (1024, 128), (128, 64), (64, 16), (16, 1)]
    params = {}
    for idx, (fan_in, fan_out) in enumerate(dims, start=1):
        key, kw, kb = jax.random.split(key, 3)
        bound = 1.0 / float(fan_in) ** 0.5
        params[f"w{idx}"] = jax.random.uniform(
            kw, (fan_in, fan_out), jnp.float32, -bound, bound)
        params[f"b{idx}"] = jax.random.uniform(
            kb, (1, fan_out), jnp.float32, -bound, bound)
    return params


def acu_reference(x, params):
    h = x
    for i in range(1, 6):
        h = jnp.dot(h, params[f"w{i}"],
                    precision=jax.lax.Precision.HIGHEST) + params[f"b{i}"]
    return h


if __name__ == "__main__":
    key = jax.random.PRNGKey(0)
    key, kx = jax.random.split(key)

    input_size = 32   # small synthetic embedding size
    batch = 16

    x = jax.random.normal(kx, (batch, input_size), jnp.float32)
    params = init_params(key, input_size)
    ref = acu_reference(x, params)

    # Exact-ish f32 path: tight tolerance vs. the layered reference.
    out_f32 = jax.block_until_ready(
        acu_forward(x, params, compute_dtype=jnp.float32))
    assert out_f32.shape == (batch, 1)
    assert jnp.allclose(out_f32, ref, atol=1e-3, rtol=1e-3), "f32 mismatch"

    # Fast bf16-MXU path (default): bf16-rounding tolerance.
    out_bf16 = jax.block_until_ready(acu_forward(x, params))
    assert out_bf16.shape == (batch, 1)
    assert jnp.allclose(out_bf16, ref, atol=5e-2, rtol=5e-2), "bf16 mismatch"

    print("KERNEL_OK")
</pallas_src>

<mosaic_0001>
module attributes {stable_mosaic.version = 11 : i64} {
  func.func @acu_kernel(%arg0: i32, %arg1: memref<16x32xf32, #tpu.memory_space<vmem>>, %arg2: memref<32x1024xf32, #tpu.memory_space<vmem>>, %arg3: memref<1x1024xf32, #tpu.memory_space<vmem>>, %arg4: memref<1024x128xf32, #tpu.memory_space<vmem>>, %arg5: memref<1x128xf32, #tpu.memory_space<vmem>>, %arg6: memref<8x128xf32, #tpu.memory_space<vmem>>, %arg7: memref<1x1xf32, #tpu.memory_space<smem>>, %arg8: memref<1x16xf32, #tpu.memory_space<vmem>>) attributes {dimension_semantics = [#tpu.dimension_semantics<parallel>], iteration_bounds = array<i64: 1>, scalar_prefetch = 0 : i64, scratch_operands = 0 : i64, tpu.core_type = #tpu.core_type<tc>, window_params = [{transform_indices = @transform_0, window_bounds = array<i64: 16, 32>}, {pipeline_mode = #tpu.pipeline_mode<synchronous>, transform_indices = @transform_1, window_bounds = array<i64: 32, 1024>}, {pipeline_mode = #tpu.pipeline_mode<synchronous>, transform_indices = @transform_2, window_bounds = array<i64: 1, 1024>}, {pipeline_mode = #tpu.pipeline_mode<synchronous>, transform_indices = @transform_3, window_bounds = array<i64: 1024, 128>}, {pipeline_mode = #tpu.pipeline_mode<synchronous>, transform_indices = @transform_4, window_bounds = array<i64: 1, 128>}, {pipeline_mode = #tpu.pipeline_mode<synchronous>, transform_indices = @transform_5, window_bounds = array<i64: 8, 128>}, {transform_indices = @transform_6, window_bounds = array<i64: 1, 1>}, {transform_indices = @transform_7, window_bounds = array<i64: 1, 16>}]} {
    %c0 = arith.constant 0 : index
    %c0_0 = arith.constant 0 : index
    %0 = vector.load %arg1[%c0, %c0_0] : memref<16x32xf32, #tpu.memory_space<vmem>>, vector<16x32xf32>
    %c0_1 = arith.constant 0 : index
    %c0_2 = arith.constant 0 : index
    %1 = vector.load %arg2[%c0_1, %c0_2] : memref<32x1024xf32, #tpu.memory_space<vmem>>, vector<32x1024xf32>
    %cst = arith.constant dense<0.000000e+00> : vector<16x1024xf32>
    %2 = tpu.matmul %0, %1, %cst {dimension_numbers = #tpu.dot_dimension_numbers<[1], [0], [0], [1], [0, 0, 1, 1], [], []>} : vector<16x32xf32>, vector<32x1024xf32>, vector<16x1024xf32> -> vector<16x1024xf32>
    %c0_3 = arith.constant 0 : index
    %c0_4 = arith.constant 0 : index
    %3 = vector.load %arg3[%c0_3, %c0_4] : memref<1x1024xf32, #tpu.memory_space<vmem>>, vector<1x1024xf32>
    %4 = vector.broadcast %3 : vector<1x1024xf32> to vector<16x1024xf32>
    %5 = arith.addf %2, %4 : vector<16x1024xf32>
    %c0_5 = arith.constant 0 : index
    %c0_6 = arith.constant 0 : index
    %6 = vector.load %arg4[%c0_5, %c0_6] : memref<1024x128xf32, #tpu.memory_space<vmem>>, vector<1024x128xf32>
    %cst_7 = arith.constant dense<0.000000e+00> : vector<16x128xf32>
    %7 = tpu.matmul %5, %6, %cst_7 {dimension_numbers = #tpu.dot_dimension_numbers<[1], [0], [0], [1], [0, 0, 1, 1], [], []>} : vector<16x1024xf32>, vector<1024x128xf32>, vector<16x128xf32> -> vector<16x128xf32>
    %c0_8 = arith.constant 0 : index
    %c0_9 = arith.constant 0 : index
    %8 = vector.load %arg5[%c0_8, %c0_9] : memref<1x128xf32, #tpu.memory_space<vmem>>, vector<1x128xf32>
    %9 = vector.broadcast %8 : vector<1x128xf32> to vector<16x128xf32>
    %10 = arith.addf %7, %9 : vector<16x128xf32>
    %c0_10 = arith.constant 0 : index
    %c0_11 = arith.constant 0 : index
    %11 = vector.load %arg6[%c0_10, %c0_11] : memref<8x128xf32, #tpu.memory_space<vmem>>, vector<8x128xf32>
    %cst_12 = arith.constant dense<0.000000e+00> : vector<8x16xf32>
    %12 = tpu.matmul %11, %10, %cst_12 {dimension_numbers = #tpu.dot_dimension_numbers<[1], [1], [0], [0], [0, 0, 1, 0], [], []>} : vector<8x128xf32>, vector<16x128xf32>, vector<8x16xf32> -> vector<8x16xf32>
    %13 = vector.extract_strided_slice %12 {offsets = [0, 0], sizes = [1, 16], strides = [1, 1]} : vector<8x16xf32> to vector<1x16xf32>
    %c0_13 = arith.constant 0 : index
    %c0_14 = arith.constant 0 : index
    %14 = memref.load %arg7[%c0_13, %c0_14] : memref<1x1xf32, #tpu.memory_space<smem>>
    %15 = vector.broadcast %14 : f32 to vector<1x16xf32>
    %16 = arith.addf %13, %15 : vector<1x16xf32>
    %c0_15 = arith.constant 0 : index
    %c0_16 = arith.constant 0 : index
    %17 = vector.load %arg8[%c0_15, %c0_16] : memref<1x16xf32, #tpu.memory_space<vmem>>, vector<1x16xf32>
    tpu.vector_store %arg8[%c0_15, %c0_16], %16 {strides = array<i32>} : memref<1x16xf32, #tpu.memory_space<vmem>>, vector<1x16xf32>,
    return
  }
  func.func @transform_0(%arg0: i32) -> (i32, i32) {
    %c0_i32 = arith.constant 0 : i32
    %c0_i32_0 = arith.constant 0 : i32
    return %arg0, %c0_i32 : i32, i32
  }
  func.func @transform_1(%arg0: i32) -> (i32, i32) {
    %c0_i32 = arith.constant 0 : i32
    %c0_i32_0 = arith.constant 0 : i32
    %c0_i32_1 = arith.constant 0 : i32
    return %c0_i32, %c0_i32_0 : i32, i32
  }
  func.func @transform_2(%arg0: i32) -> (i32, i32) {
    %c0_i32 = arith.constant 0 : i32
    %c0_i32_0 = arith.constant 0 : i32
    %c0_i32_1 = arith.constant 0 : i32
    return %c0_i32, %c0_i32_0 : i32, i32
  }
  func.func @transform_3(%arg0: i32) -> (i32, i32) {
    %c0_i32 = arith.constant 0 : i32
    %c0_i32_0 = arith.constant 0 : i32
    %c0_i32_1 = arith.constant 0 : i32
    return %c0_i32, %c0_i32_0 : i32, i32
  }
  func.func @transform_4(%arg0: i32) -> (i32, i32) {
    %c0_i32 = arith.constant 0 : i32
    %c0_i32_0 = arith.constant 0 : i32
    %c0_i32_1 = arith.constant 0 : i32
    return %c0_i32, %c0_i32_0 : i32, i32
  }
  func.func @transform_5(%arg0: i32) -> (i32, i32) {
    %c0_i32 = arith.constant 0 : i32
    %c0_i32_0 = arith.constant 0 : i32
    %c0_i32_1 = arith.constant 0 : i32
    return %c0_i32, %c0_i32_0 : i32, i32
  }
  func.func @transform_6(%arg0: i32) -> (i32, i32) {
    %c0_i32 = arith.constant 0 : i32
    %c0_i32_0 = arith.constant 0 : i32
    %c0_i32_1 = arith.constant 0 : i32
    return %c0_i32, %c0_i32_0 : i32, i32
  }
  func.func @transform_7(%arg0: i32) -> (i32, i32) {
    %c0_i32 = arith.constant 0 : i32
    %c0_i32_0 = arith.constant 0 : i32
    return %c0_i32, %arg0 : i32, i32
  }
}

</mosaic_0001>

<llo_original>
// kernel: tpu_custom_call.1
$region0: #{tpu_custom_call.1}
  #allocation0 [shape = 'u32[]', space=smem, size = 0x4, offset = 0x4, fixed_abs, tag = 'smem constant byte address 0x4 - core index']
  #allocation1 [shape = 'u32[144,128]{1,0:T(1,128)}', space=vmem, size = 0x12000, scoped, tag = 'internal scratch']
  #allocation2 [shape = 'f32[1,1]{1,0:T(1,128)S(6)}', space=smem, size = 0x200, scoped, tag = 'scoped memory for tpu_custom_call.1']
  %s0 = inlined_call_operand.hbm [shape: f32[16,32], index: 0, kind: input, shape index: {}]
  %s1 = inlined_call_operand.hbm [shape: f32[32,1024], index: 1, kind: input, shape index: {}]
  %s2 = inlined_call_operand.hbm [shape: f32[1,1024], index: 2, kind: input, shape index: {}]
  %s3 = inlined_call_operand.hbm [shape: f32[1024,128], index: 3, kind: input, shape index: {}]
  %s4 = inlined_call_operand.vmem [shape: f32[1,128], index: 4, kind: input, shape index: {}]
  %s5 = inlined_call_operand.vmem [shape: f32[8,128], index: 5, kind: input, shape index: {}]
  %s6 = inlined_call_operand.<no memory space> [shape: f32[1,1], index: 6, kind: input, shape index: {}]
  %s7 = inlined_call_operand.hbm [shape: f32[1,16], index: 7, kind: output, shape index: {}]
  %s8 = sld [smem:[#allocation0]]
  $region54: #{tpu_custom_call.1} parent=0
    _
  %s10 = ssub.s32 1, %s8
  %s11 = scalar_select 0, %s10, %s8
  %12 = sst [smem:[#allocation2]] %s6
  $region1: #{tpu_custom_call.1} parent=0
    #allocation3 [shape = 'u8[8192]{0}', space=vmem, size = 0x2000, scoped, tag = 'input window, operand 0, single buffered']
    #allocation4 [shape = 's32[1]{0}', space=sflag, size = 0x4, scoped, tag = 'scoped memory for tpu_custom_call.1']
    #allocation5 [shape = 's32[1]{0}', space=sflag, size = 0x4, scoped, tag = 'scoped memory for tpu_custom_call.1']
    #allocation6 [shape = 'u8[131072]{0}', space=vmem, size = 0x20000, scoped, tag = 'input window, operand 1, single buffered']
    #allocation7 [shape = 's32[1]{0}', space=sflag, size = 0x4, scoped, tag = 'scoped memory for tpu_custom_call.1']
    #allocation8 [shape = 'u8[4096]{0}', space=vmem, size = 0x1000, scoped, tag = 'input window, operand 2, single buffered']
    #allocation9 [shape = 'u8[524288]{0}', space=vmem, size = 0x80000, scoped, tag = 'input window, operand 3, single buffered']
    #allocation10 [shape = 's32[1]{0}', space=sflag, size = 0x4, scoped, tag = 'scoped memory for tpu_custom_call.1']
    #allocation11 [shape = 'u8[512]{0}', space=vmem, size = 0x400, scoped, tag = 'output window, operand 0, single buffered']
    %13 = vsyncpa [#allocation4], 0
    %14 = vsyncpa [#allocation7], 0
    %15 = vsyncpa [#allocation10], 0
    %16 = vsyncpa [#allocation5], 0
    // Predicated region
    $region2: #{tpu_custom_call.1} parent=1 // pred_check
      _
    $region3: #{tpu_custom_call.1} parent=1 // pred_check_branch
      %18 = sbr.rel (0) target = $region5
    $region4: #{tpu_custom_call.1} parent=1 // pred_region
      %s20 = ssub.s32 256, 256
      %21 = vsyncadd [#allocation4], %s20
      %s22 = sshll.u32 [#allocation3], 4
      %s23 = int_to_ptr.vmem [resolvable:$true] %s22
      %28 = dma.hbm_to_vmem [thread:$0]  %s0, 256, %s23, [#allocation4], 128, 128, 8
    $region5: #{tpu_custom_call.1} parent=1 // pred_fallthru
      _
    // Predicated region
    $region6: #{tpu_custom_call.1} parent=1 // pred_check
      _
    $region7: #{tpu_custom_call.1} parent=1 // pred_check_branch
      %30 = sbr.rel (0) target = $region9
    $region8: #{tpu_custom_call.1} parent=1 // pred_region
      %s32 = ssub.s32 4096, 4096
      %33 = vsyncadd [#allocation7], %s32
      %s34 = sshll.u32 [#allocation6], 4
      %s35 = int_to_ptr.vmem [resolvable:$true] %s34
      %40 = dma.hbm_to_vmem [thread:$0]  %s1, 4096, %s35, [#allocation7], 1024, 1024, 64
    $region9: #{tpu_custom_call.1} parent=1 // pred_fallthru
      _
    // Predicated region
    $region10: #{tpu_custom_call.1} parent=1 // pred_check
      _
    $region11: #{tpu_custom_call.1} parent=1 // pred_check_branch
      %42 = sbr.rel (0) target = $region13
    $region12: #{tpu_custom_call.1} parent=1 // pred_region
      %s44 = ssub.s32 128, 128
      %45 = vsyncadd [#allocation7], %s44
      %s47 = sshll.u32 [#allocation8], 4
      %s48 = int_to_ptr.vmem [resolvable:$true] %s47
      %50 = dma.hbm_to_vmem [thread:$0]  %s2, 128, %s48, [#allocation7]
    $region13: #{tpu_custom_call.1} parent=1 // pred_fallthru
      _
    // Predicated region
    $region14: #{tpu_custom_call.1} parent=1 // pred_check
      _
    $region15: #{tpu_custom_call.1} parent=1 // pred_check_branch
      %52 = sbr.rel (0) target = $region17
    $region16: #{tpu_custom_call.1} parent=1 // pred_region
      %s54 = ssub.s32 16384, 16384
      %55 = vsyncadd [#allocation10], %s54
      %s56 = sshll.u32 [#allocation9], 4
      %s57 = int_to_ptr.vmem [resolvable:$true] %s56
      %62 = dma.hbm_to_vmem [thread:$0]  %s3, 16384, %s57, [#allocation10], 128, 128, 8
    $region17: #{tpu_custom_call.1} parent=1 // pred_fallthru
      _
    // Predicated region
    $region18: #{tpu_custom_call.1} parent=1 // pred_check
      _
    $region19: #{tpu_custom_call.1} parent=1 // pred_check_branch
      %64 = sbr.rel (0) target = $region21
    $region20: #{tpu_custom_call.1} parent=1 // pred_region
      _
    $region21: #{tpu_custom_call.1} parent=1 // pred_fallthru
      _
    // Predicated region
    $region22: #{tpu_custom_call.1} parent=1 // pred_check
      _
    $region23: #{tpu_custom_call.1} parent=1 // pred_check_branch
      %66 = sbr.rel (0) target = $region25
    $region24: #{tpu_custom_call.1} parent=1 // pred_region
      _
    $region25: #{tpu_custom_call.1} parent=1 // pred_fallthru
      _
    // Predicated region
    $region26: #{tpu_custom_call.1} parent=1 // pred_check
      _
    $region27: #{tpu_custom_call.1} parent=1 // pred_check_branch
      %68 = sbr.rel (0) target = $region29
    $region28: #{tpu_custom_call.1} parent=1 // pred_region
      _
    $region29: #{tpu_custom_call.1} parent=1 // pred_fallthru
      _
    // Predicated region
    $region30: #{tpu_custom_call.1} parent=1 // pred_check
      _
    $region31: #{tpu_custom_call.1} parent=1 // pred_check_branch
      %70 = sbr.rel (0) target = $region33
    $region32: #{tpu_custom_call.1} parent=1 // pred_region
      %71 = dma.done [#allocation4], 256
    $region33: #{tpu_custom_call.1} parent=1 // pred_fallthru
      _
    // Predicated region
    $region34: #{tpu_custom_call.1} parent=1 // pred_check
      _
    $region35: #{tpu_custom_call.1} parent=1 // pred_check_branch
      %73 = sbr.rel (0) target = $region37
    $region36: #{tpu_custom_call.1} parent=1 // pred_region
      %74 = dma.done [#allocation7], 4096
    $region37: #{tpu_custom_call.1} parent=1 // pred_fallthru
      _
    // Predicated region
    $region38: #{tpu_custom_call.1} parent=1 // pred_check
      _
    $region39: #{tpu_custom_call.1} parent=1 // pred_check_branch
      %76 = sbr.rel (0) target = $region41
    $region40: #{tpu_custom_call.1} parent=1 // pred_region
      %77 = dma.done [#allocation7], 128
    $region41: #{tpu_custom_call.1} parent=1 // pred_fallthru
      _
    // Predicated region
    $region42: #{tpu_custom_call.1} parent=1 // pred_check
      _
    $region43: #{tpu_custom_call.1} parent=1 // pred_check_branch
      %79 = sbr.rel (0) target = $region45
    $region44: #{tpu_custom_call.1} parent=1 // pred_region
      %80 = dma.done [#allocation10], 16384
    $region45: #{tpu_custom_call.1} parent=1 // pred_fallthru
      _
    %v81 = vld [vmem:[#allocation3] sm:$0xff]
    %v82 = vld [vmem:[#allocation3 + $0x8] sm:$0xff]
    %v83 = vld [vmem:[#allocation6] sm:$0xff]
    %v84 = vld [vmem:[#allocation6 + $0x8] sm:$0xff]
    %v85 = vld [vmem:[#allocation6 + $0x10] sm:$0xff]
    %v86 = vld [vmem:[#allocation6 + $0x18] sm:$0xff]
    %v87 = vld [vmem:[#allocation6 + $0x20] sm:$0xff]
    %v88 = vld [vmem:[#allocation6 + $0x28] sm:$0xff]
    %v89 = vld [vmem:[#allocation6 + $0x30] sm:$0xff]
    %v90 = vld [vmem:[#allocation6 + $0x38] sm:$0xff]
    %v91 = vld [vmem:[#allocation6 + $0x40] sm:$0xff]
    %v92 = vld [vmem:[#allocation6 + $0x48] sm:$0xff]
    %v93 = vld [vmem:[#allocation6 + $0x50] sm:$0xff]
    %v94 = vld [vmem:[#allocation6 + $0x58] sm:$0xff]
    %v95 = vld [vmem:[#allocation6 + $0x60] sm:$0xff]
    %v96 = vld [vmem:[#allocation6 + $0x68] sm:$0xff]
    %v97 = vld [vmem:[#allocation6 + $0x70] sm:$0xff]
    %v98 = vld [vmem:[#allocation6 + $0x78] sm:$0xff]
    %v99 = vld [vmem:[#allocation6 + $0x80] sm:$0xff]
    %v100 = vld [vmem:[#allocation6 + $0x88] sm:$0xff]
    %v101 = vld [vmem:[#allocation6 + $0x90] sm:$0xff]
    %v102 = vld [vmem:[#allocation6 + $0x98] sm:$0xff]
    %v103 = vld [vmem:[#allocation6 + $0xa0] sm:$0xff]
    %v104 = vld [vmem:[#allocation6 + $0xa8] sm:$0xff]
    %v105 = vld [vmem:[#allocation6 + $0xb0] sm:$0xff]
    %v106 = vld [vmem:[#allocation6 + $0xb8] sm:$0xff]
    %v107 = vld [vmem:[#allocation6 + $0xc0] sm:$0xff]
    %v108 = vld [vmem:[#allocation6 + $0xc8] sm:$0xff]
    %v109 = vld [vmem:[#allocation6 + $0xd0] sm:$0xff]
    %v110 = vld [vmem:[#allocation6 + $0xd8] sm:$0xff]
    %v111 = vld [vmem:[#allocation6 + $0xe0] sm:$0xff]
    %v112 = vld [vmem:[#allocation6 + $0xe8] sm:$0xff]
    %v113 = vld [vmem:[#allocation6 + $0xf0] sm:$0xff]
    %v114 = vld [vmem:[#allocation6 + $0xf8] sm:$0xff]
    %v115 = vld [vmem:[#allocation8] sm:$0xff]
    %v117 = vlaneseq
    %v118 = vshrl.u32 %v117, 7
    %v119 = vsub.s32 0, %v118
    %v120 = vrot.slane %v115, %v119
    %v121 = vlaneseq
    %v122 = vshrl.u32 %v121, 7
    %v123 = vsub.s32 1, %v122
    %v124 = vrot.slane %v115, %v123
    %v125 = vlaneseq
    %v126 = vshrl.u32 %v125, 7
    %v127 = vsub.s32 2, %v126
    %v128 = vrot.slane %v115, %v127
    %v129 = vlaneseq
    %v130 = vshrl.u32 %v129, 7
    %v131 = vsub.s32 3, %v130
    %v132 = vrot.slane %v115, %v131
    %v133 = vlaneseq
    %v134 = vshrl.u32 %v133, 7
    %v135 = vsub.s32 4, %v134
    %v136 = vrot.slane %v115, %v135
    %v137 = vlaneseq
    %v138 = vshrl.u32 %v137, 7
    %v139 = vsub.s32 5, %v138
    %v140 = vrot.slane %v115, %v139
    %v141 = vlaneseq
    %v142 = vshrl.u32 %v141, 7
    %v143 = vsub.s32 6, %v142
    %v144 = vrot.slane %v115, %v143
    %v145 = vlaneseq
    %v146 = vshrl.u32 %v145, 7
    %v147 = vsub.s32 7, %v146
    %v148 = vrot.slane %v115, %v147
    %vm157 = vcmask 261120
    %v159 = vsel %vm157, %v81, 0
    %v162 = vsel %vm157, %v82, 0
    %164 = vmatprep.subr.mxu0 0.0
    %165 = vmatpush1.msra.mxu0 0.0
    %166 = vmatprep.subr.mxu0 0.0
    %167 = vmatpush1.msra.mxu0 0.0
    %168 = vmatprep.subr.mxu0 0.0
    %169 = vmatpush1.msra.mxu0 0.0
    %170 = vmatprep.subr.mxu0 0.0
    %171 = vmatpush1.msra.mxu0 0.0
    %172 = vmatprep.subr.mxu0 0.0
    %173 = vmatpush1.msra.mxu0 0.0
    %174 = vmatprep.subr.mxu0 0.0
    %175 = vmatpush1.msra.mxu0 0.0
    %176 = vmatprep.subr.mxu0 0.0
    %177 = vmatpush1.msra.mxu0 0.0
    %178 = vmatprep.subr.mxu0 0.0
    %179 = vmatpush1.msra.mxu0 0.0
    %180 = vmatprep.subr.mxu0 0.0
    %181 = vmatpush1.msra.mxu0 0.0
    %182 = vmatprep.subr.mxu0 0.0
    %183 = vmatpush1.msra.mxu0 0.0
    %184 = vmatprep.subr.mxu0 0.0
    %185 = vmatpush1.msra.mxu0 0.0
    %186 = vmatprep.subr.mxu0 0.0
    %187 = vmatpush1.msra.mxu0 0.0
    %188 = vmatprep.subr.mxu0 %v108
    %189 = vmatpush1.msra.mxu0 %v107
    %190 = vmatprep.subr.mxu0 %v100
    %191 = vmatpush1.msra.mxu0 %v99
    %192 = vmatprep.subr.mxu0 %v92
    %193 = vmatpush1.msra.mxu0 %v91
    %194 = vmatprep.subr.mxu0 %v84
    %195 = vmatpush1.msra.mxu0 %v83
    %196 = vmatprep.subr.mxu0 0.0
    %197 = vmatpush2.msra.mxu0 0.0
    %198 = vmatprep.subr.mxu0 0.0
    %199 = vmatpush2.msra.mxu0 0.0
    %200 = vmatprep.subr.mxu0 0.0
    %201 = vmatpush2.msra.mxu0 0.0
    %202 = vmatprep.subr.mxu0 0.0
    %203 = vmatpush2.msra.mxu0 0.0
    %204 = vmatprep.subr.mxu0 0.0
    %205 = vmatpush2.msra.mxu0 0.0
    %206 = vmatprep.subr.mxu0 0.0
    %207 = vmatpush2.msra.mxu0 0.0
    %208 = vmatprep.subr.mxu0 0.0
    %209 = vmatpush2.msra.mxu0 0.0
    %210 = vmatprep.subr.mxu0 0.0
    %211 = vmatpush2.msra.mxu0 0.0
    %212 = vmatprep.subr.mxu0 0.0
    %213 = vmatpush2.msra.mxu0 0.0
    %214 = vmatprep.subr.mxu0 0.0
    %215 = vmatpush2.msra.mxu0 0.0
    %216 = vmatprep.subr.mxu0 0.0
    %217 = vmatpush2.msra.mxu0 0.0
    %218 = vmatprep.subr.mxu0 0.0
    %219 = vmatpush2.msra.mxu0 0.0
    %220 = vmatprep.subr.mxu0 0.0
    %221 = vmatpush2.msra.mxu0 0.0
    %222 = vmatprep.subr.mxu0 0.0
    %223 = vmatpush2.msra.mxu0 0.0
    %224 = vmatprep.subr.mxu0 0.0
    %225 = vmatpush2.msra.mxu0 0.0
    %226 = vmatprep.subr.mxu0 0.0
    %227 = vmatpush2.msra.mxu0 0.0
    %228 = vmatprep.mubr.f32.mxu0 0.0
    %229 = vmatmul.mubr.f32.gmra.mxu0 %v159
    %v230 = vpop.f32.mrf.mxu0
    %v231 = vadd.f32 %v120, %v230
    %v232 = vpop.f32.mrf.mxu0
    %v233 = vadd.f32 %v124, %v232
    %234 = vmatprep.mubr.f32.mxu0 0.0
    %235 = vmatmul.mubr.f32.gmra.mxu0 %v162
    %v236 = vpop.f32.mrf.mxu0
    %v237 = vadd.f32 %v120, %v236
    %v238 = vpop.f32.mrf.mxu0
    %v239 = vadd.f32 %v124, %v238
    %240 = vdwg.mxu0
    %241 = vmatprep.subr.mxu0 0.0
    %242 = vmatpush1.msra.mxu0 0.0
    %243 = vmatprep.subr.mxu0 0.0
    %244 = vmatpush1.msra.mxu0 0.0
    %245 = vmatprep.subr.mxu0 0.0
    %246 = vmatpush1.msra.mxu0 0.0
    %247 = vmatprep.subr.mxu0 0.0
    %248 = vmatpush1.msra.mxu0 0.0
    %249 = vmatprep.subr.mxu0 0.0
    %250 = vmatpush1.msra.mxu0 0.0
    %251 = vmatprep.subr.mxu0 0.0
    %252 = vmatpush1.msra.mxu0 0.0
    %253 = vmatprep.subr.mxu0 0.0
    %254 = vmatpush1.msra.mxu0 0.0
    %255 = vmatprep.subr.mxu0 0.0
    %256 = vmatpush1.msra.mxu0 0.0
    %257 = vmatprep.subr.mxu0 0.0
    %258 = vmatpush1.msra.mxu0 0.0
    %259 = vmatprep.subr.mxu0 0.0
    %260 = vmatpush1.msra.mxu0 0.0
    %261 = vmatprep.subr.mxu0 0.0
    %262 = vmatpush1.msra.mxu0 0.0
    %263 = vmatprep.subr.mxu0 0.0
    %264 = vmatpush1.msra.mxu0 0.0
    %265 = vmatprep.subr.mxu0 %v110
    %266 = vmatpush1.msra.mxu0 %v109
    %267 = vmatprep.subr.mxu0 %v102
    %268 = vmatpush1.msra.mxu0 %v101
    %269 = vmatprep.subr.mxu0 %v94
    %270 = vmatpush1.msra.mxu0 %v93
    %271 = vmatprep.subr.mxu0 %v86
    %272 = vmatpush1.msra.mxu0 %v85
    %273 = vmatprep.subr.mxu0 0.0
    %274 = vmatpush2.msra.mxu0 0.0
    %275 = vmatprep.subr.mxu0 0.0
    %276 = vmatpush2.msra.mxu0 0.0
    %277 = vmatprep.subr.mxu0 0.0
    %278 = vmatpush2.msra.mxu0 0.0
    %279 = vmatprep.subr.mxu0 0.0
    %280 = vmatpush2.msra.mxu0 0.0
    %281 = vmatprep.subr.mxu0 0.0
    %282 = vmatpush2.msra.mxu0 0.0
    %283 = vmatprep.subr.mxu0 0.0
    %284 = vmatpush2.msra.mxu0 0.0
    %285 = vmatprep.subr.mxu0 0.0
    %286 = vmatpush2.msra.mxu0 0.0
    %287 = vmatprep.subr.mxu0 0.0
    %288 = vmatpush2.msra.mxu0 0.0
    %289 = vmatprep.subr.mxu0 0.0
    %290 = vmatpush2.msra.mxu0 0.0
    %291 = vmatprep.subr.mxu0 0.0
    %292 = vmatpush2.msra.mxu0 0.0
    %293 = vmatprep.subr.mxu0 0.0
    %294 = vmatpush2.msra.mxu0 0.0
    %295 = vmatprep.subr.mxu0 0.0
    %296 = vmatpush2.msra.mxu0 0.0
    %297 = vmatprep.subr.mxu0 0.0
    %298 = vmatpush2.msra.mxu0 0.0
    %299 = vmatprep.subr.mxu0 0.0
    %300 = vmatpush2.msra.mxu0 0.0
    %301 = vmatprep.subr.mxu0 0.0
    %302 = vmatpush2.msra.mxu0 0.0
    %303 = vmatprep.subr.mxu0 0.0
    %304 = vmatpush2.msra.mxu0 0.0
    %305 = vmatprep.mubr.f32.mxu0 0.0
    %306 = vmatmul.mubr.f32.gmra.mxu0 %v159
    %v307 = vpop.f32.mrf.mxu0
    %v308 = vadd.f32 %v128, %v307
    %v309 = vpop.f32.mrf.mxu0
    %v310 = vadd.f32 %v132, %v309
    %311 = vmatprep.mubr.f32.mxu0 0.0
    %312 = vmatmul.mubr.f32.gmra.mxu0 %v162
    %v313 = vpop.f32.mrf.mxu0
    %v314 = vadd.f32 %v128, %v313
    %v315 = vpop.f32.mrf.mxu0
    %v316 = vadd.f32 %v132, %v315
    %317 = vdwg.mxu0
    %318 = vmatprep.subr.mxu0 0.0
    %319 = vmatpush1.msra.mxu0 0.0
    %320 = vmatprep.subr.mxu0 0.0
    %321 = vmatpush1.msra.mxu0 0.0
    %322 = vmatprep.subr.mxu0 0.0
    %323 = vmatpush1.msra.mxu0 0.0
    %324 = vmatprep.subr.mxu0 0.0
    %325 = vmatpush1.msra.mxu0 0.0
    %326 = vmatprep.subr.mxu0 0.0
    %327 = vmatpush1.msra.mxu0 0.0
    %328 = vmatprep.subr.mxu0 0.0
    %329 = vmatpush1.msra.mxu0 0.0
    %330 = vmatprep.subr.mxu0 0.0
    %331 = vmatpush1.msra.mxu0 0.0
    %332 = vmatprep.subr.mxu0 0.0
    %333 = vmatpush1.msra.mxu0 0.0
    %334 = vmatprep.subr.mxu0 0.0
    %335 = vmatpush1.msra.mxu0 0.0
    %336 = vmatprep.subr.mxu0 0.0
    %337 = vmatpush1.msra.mxu0 0.0
    %338 = vmatprep.subr.mxu0 0.0
    %339 = vmatpush1.msra.mxu0 0.0
    %340 = vmatprep.subr.mxu0 0.0
    %341 = vmatpush1.msra.mxu0 0.0
    %342 = vmatprep.subr.mxu0 %v112
    %343 = vmatpush1.msra.mxu0 %v111
    %344 = vmatprep.subr.mxu0 %v104
    %345 = vmatpush1.msra.mxu0 %v103
    %346 = vmatprep.subr.mxu0 %v96
    %347 = vmatpush1.msra.mxu0 %v95
    %348 = vmatprep.subr.mxu0 %v88
    %349 = vmatpush1.msra.mxu0 %v87
    %350 = vmatprep.subr.mxu0 0.0
    %351 = vmatpush2.msra.mxu0 0.0
    %352 = vmatprep.subr.mxu0 0.0
    %353 = vmatpush2.msra.mxu0 0.0
    %354 = vmatprep.subr.mxu0 0.0
    %355 = vmatpush2.msra.mxu0 0.0
    %356 = vmatprep.subr.mxu0 0.0
    %357 = vmatpush2.msra.mxu0 0.0
    %358 = vmatprep.subr.mxu0 0.0
    %359 = vmatpush2.msra.mxu0 0.0
    %360 = vmatprep.subr.mxu0 0.0
    %361 = vmatpush2.msra.mxu0 0.0
    %362 = vmatprep.subr.mxu0 0.0
    %363 = vmatpush2.msra.mxu0 0.0
    %364 = vmatprep.subr.mxu0 0.0
    %365 = vmatpush2.msra.mxu0 0.0
    %366 = vmatprep.subr.mxu0 0.0
    %367 = vmatpush2.msra.mxu0 0.0
    %368 = vmatprep.subr.mxu0 0.0
    %369 = vmatpush2.msra.mxu0 0.0
    %370 = vmatprep.subr.mxu0 0.0
    %371 = vmatpush2.msra.mxu0 0.0
    %372 = vmatprep.subr.mxu0 0.0
    %373 = vmatpush2.msra.mxu0 0.0
    %374 = vmatprep.subr.mxu0 0.0
    %375 = vmatpush2.msra.mxu0 0.0
    %376 = vmatprep.subr.mxu0 0.0
    %377 = vmatpush2.msra.mxu0 0.0
    %378 = vmatprep.subr.mxu0 0.0
    %379 = vmatpush2.msra.mxu0 0.0
    %380 = vmatprep.subr.mxu0 0.0
    %381 = vmatpush2.msra.mxu0 0.0
    %382 = vmatprep.mubr.f32.mxu0 0.0
    %383 = vmatmul.mubr.f32.gmra.mxu0 %v159
    %v384 = vpop.f32.mrf.mxu0
    %v385 = vadd.f32 %v136, %v384
    %v386 = vpop.f32.mrf.mxu0
    %v387 = vadd.f32 %v140, %v386
    %388 = vmatprep.mubr.f32.mxu0 0.0
    %389 = vmatmul.mubr.f32.gmra.mxu0 %v162
    %v390 = vpop.f32.mrf.mxu0
    %v391 = vadd.f32 %v136, %v390
    %v392 = vpop.f32.mrf.mxu0
    %v393 = vadd.f32 %v140, %v392
    %394 = vdwg.mxu0
    %395 = vmatprep.subr.mxu0 0.0
    %396 = vmatpush1.msra.mxu0 0.0
    %397 = vmatprep.subr.mxu0 0.0
    %398 = vmatpush1.msra.mxu0 0.0
    %399 = vmatprep.subr.mxu0 0.0
    %400 = vmatpush1.msra.mxu0 0.0
    %401 = vmatprep.subr.mxu0 0.0
    %402 = vmatpush1.msra.mxu0 0.0
    %403 = vmatprep.subr.mxu0 0.0
    %404 = vmatpush1.msra.mxu0 0.0
    %405 = vmatprep.subr.mxu0 0.0
    %406 = vmatpush1.msra.mxu0 0.0
    %407 = vmatprep.subr.mxu0 0.0
    %408 = vmatpush1.msra.mxu0 0.0
    %409 = vmatprep.subr.mxu0 0.0
    %410 = vmatpush1.msra.mxu0 0.0
    %411 = vmatprep.subr.mxu0 0.0
    %412 = vmatpush1.msra.mxu0 0.0
    %413 = vmatprep.subr.mxu0 0.0
    %414 = vmatpush1.msra.mxu0 0.0
    %415 = vmatprep.subr.mxu0 0.0
    %416 = vmatpush1.msra.mxu0 0.0
    %417 = vmatprep.subr.mxu0 0.0
    %418 = vmatpush1.msra.mxu0 0.0
    %419 = vmatprep.subr.mxu0 %v114
    %420 = vmatpush1.msra.mxu0 %v113
    %421 = vmatprep.subr.mxu0 %v106
    %422 = vmatpush1.msra.mxu0 %v105
    %423 = vmatprep.subr.mxu0 %v98
    %424 = vmatpush1.msra.mxu0 %v97
    %425 = vmatprep.subr.mxu0 %v90
    %426 = vmatpush1.msra.mxu0 %v89
    %427 = vmatprep.subr.mxu0 0.0
    %428 = vmatpush2.msra.mxu0 0.0
    %429 = vmatprep.subr.mxu0 0.0
    %430 = vmatpush2.msra.mxu0 0.0
    %431 = vmatprep.subr.mxu0 0.0
    %432 = vmatpush2.msra.mxu0 0.0
    %433 = vmatprep.subr.mxu0 0.0
    %434 = vmatpush2.msra.mxu0 0.0
    %435 = vmatprep.subr.mxu0 0.0
    %436 = vmatpush2.msra.mxu0 0.0
    %437 = vmatprep.subr.mxu0 0.0
    %438 = vmatpush2.msra.mxu0 0.0
    %439 = vmatprep.subr.mxu0 0.0
    %440 = vmatpush2.msra.mxu0 0.0
    %441 = vmatprep.subr.mxu0 0.0
    %442 = vmatpush2.msra.mxu0 0.0
    %443 = vmatprep.subr.mxu0 0.0
    %444 = vmatpush2.msra.mxu0 0.0
    %445 = vmatprep.subr.mxu0 0.0
    %446 = vmatpush2.msra.mxu0 0.0
    %447 = vmatprep.subr.mxu0 0.0
    %448 = vmatpush2.msra.mxu0 0.0
    %449 = vmatprep.subr.mxu0 0.0
    %450 = vmatpush2.msra.mxu0 0.0
    %451 = vmatprep.subr.mxu0 0.0
    %452 = vmatpush2.msra.mxu0 0.0
    %453 = vmatprep.subr.mxu0 0.0
    %454 = vmatpush2.msra.mxu0 0.0
    %455 = vmatprep.subr.mxu0 0.0
    %456 = vmatpush2.msra.mxu0 0.0
    %457 = vmatprep.subr.mxu0 0.0
    %458 = vmatpush2.msra.mxu0 0.0
    %459 = vmatprep.mubr.f32.mxu0 0.0
    %460 = vmatmul.mubr.f32.gmra.mxu0 %v159
    %v461 = vpop.f32.mrf.mxu0
    %v462 = vadd.f32 %v144, %v461
    %v463 = vpop.f32.mrf.mxu0
    %v464 = vadd.f32 %v148, %v463
    %465 = vmatprep.mubr.f32.mxu0 0.0
    %466 = vmatmul.mubr.f32.gmra.mxu0 %v162
    %v467 = vpop.f32.mrf.mxu0
    %v468 = vadd.f32 %v144, %v467
    %v469 = vpop.f32.mrf.mxu0
    %v470 = vadd.f32 %v148, %v469
    %471 = vdwg.mxu0
    %v472 = vld [vmem:[#allocation9] sm:$0xff]
    %v473 = vld [vmem:[#allocation9 + $0x8] sm:$0xff]
    %v474 = vld [vmem:[#allocation9 + $0x10] sm:$0xff]
    %v475 = vld [vmem:[#allocation9 + $0x18] sm:$0xff]
    %v476 = vld [vmem:[#allocation9 + $0x20] sm:$0xff]
    %v477 = vld [vmem:[#allocation9 + $0x28] sm:$0xff]
    %v478 = vld [vmem:[#allocation9 + $0x30] sm:$0xff]
    %v479 = vld [vmem:[#allocation9 + $0x38] sm:$0xff]
    %v480 = vld [vmem:[#allocation9 + $0x40] sm:$0xff]
    %v481 = vld [vmem:[#allocation9 + $0x48] sm:$0xff]
    %v482 = vld [vmem:[#allocation9 + $0x50] sm:$0xff]
    %v483 = vld [vmem:[#allocation9 + $0x58] sm:$0xff]
    %v484 = vld [vmem:[#allocation9 + $0x60] sm:$0xff]
    %v485 = vld [vmem:[#allocation9 + $0x68] sm:$0xff]
    %v486 = vld [vmem:[#allocation9 + $0x70] sm:$0xff]
    %v487 = vld [vmem:[#allocation9 + $0x78] sm:$0xff]
    %v488 = vld [vmem:[#allocation9 + $0x80] sm:$0xff]
    %v489 = vld [vmem:[#allocation9 + $0x88] sm:$0xff]
    %v490 = vld [vmem:[#allocation9 + $0x90] sm:$0xff]
    %v491 = vld [vmem:[#allocation9 + $0x98] sm:$0xff]
    %v492 = vld [vmem:[#allocation9 + $0xa0] sm:$0xff]
    %v493 = vld [vmem:[#allocation9 + $0xa8] sm:$0xff]
    %v494 = vld [vmem:[#allocation9 + $0xb0] sm:$0xff]
    %v495 = vld [vmem:[#allocation9 + $0xb8] sm:$0xff]
    %v496 = vld [vmem:[#allocation9 + $0xc0] sm:$0xff]
    %v497 = vld [vmem:[#allocation9 + $0xc8] sm:$0xff]
    %v498 = vld [vmem:[#allocation9 + $0xd0] sm:$0xff]
    %v499 = vld [vmem:[#allocation9 + $0xd8] sm:$0xff]
    %v500 = vld [vmem:[#allocation9 + $0xe0] sm:$0xff]
    %v501 = vld [vmem:[#allocation9 + $0xe8] sm:$0xff]
    %v502 = vld [vmem:[#allocation9 + $0xf0] sm:$0xff]
    %v503 = vld [vmem:[#allocation9 + $0xf8] sm:$0xff]
    %v504 = vld [vmem:[#allocation9 + $0x100] sm:$0xff]
    %v505 = vld [vmem:[#allocation9 + $0x108] sm:$0xff]
    %v506 = vld [vmem:[#allocation9 + $0x110] sm:$0xff]
    %v507 = vld [vmem:[#allocation9 + $0x118] sm:$0xff]
    %v508 = vld [vmem:[#allocation9 + $0x120] sm:$0xff]
    %v509 = vld [vmem:[#allocation9 + $0x128] sm:$0xff]
    %v510 = vld [vmem:[#allocation9 + $0x130] sm:$0xff]
    %v511 = vld [vmem:[#allocation9 + $0x138] sm:$0xff]
    %v512 = vld [vmem:[#allocation9 + $0x140] sm:$0xff]
    %v513 = vld [vmem:[#allocation9 + $0x148] sm:$0xff]
    %v514 = vld [vmem:[#allocation9 + $0x150] sm:$0xff]
    %v515 = vld [vmem:[#allocation9 + $0x158] sm:$0xff]
    %v516 = vld [vmem:[#allocation9 + $0x160] sm:$0xff]
    %v517 = vld [vmem:[#allocation9 + $0x168] sm:$0xff]
    %v518 = vld [vmem:[#allocation9 + $0x170] sm:$0xff]
    %v519 = vld [vmem:[#allocation9 + $0x178] sm:$0xff]
    %v520 = vld [vmem:[#allocation9 + $0x180] sm:$0xff]
    %v521 = vld [vmem:[#allocation9 + $0x188] sm:$0xff]
    %v522 = vld [vmem:[#allocation9 + $0x190] sm:$0xff]
    %v523 = vld [vmem:[#allocation9 + $0x198] sm:$0xff]
    %v524 = vld [vmem:[#allocation9 + $0x1a0] sm:$0xff]
    %v525 = vld [vmem:[#allocation9 + $0x1a8] sm:$0xff]
    %v526 = vld [vmem:[#allocation9 + $0x1b0] sm:$0xff]
    %v527 = vld [vmem:[#allocation9 + $0x1b8] sm:$0xff]
    %v528 = vld [vmem:[#allocation9 + $0x1c0] sm:$0xff]
    %v529 = vld [vmem:[#allocation9 + $0x1c8] sm:$0xff]
    %v530 = vld [vmem:[#allocation9 + $0x1d0] sm:$0xff]
    %v531 = vld [vmem:[#allocation9 + $0x1d8] sm:$0xff]
    %v532 = vld [vmem:[#allocation9 + $0x1e0] sm:$0xff]
    %v533 = vld [vmem:[#allocation9 + $0x1e8] sm:$0xff]
    %v534 = vld [vmem:[#allocation9 + $0x1f0] sm:$0xff]
    %v535 = vld [vmem:[#allocation9 + $0x1f8] sm:$0xff]
    %v536 = vld [vmem:[#allocation9 + $0x200] sm:$0xff]
    %v537 = vld [vmem:[#allocation9 + $0x208] sm:$0xff]
    %v538 = vld [vmem:[#allocation9 + $0x210] sm:$0xff]
    %v539 = vld [vmem:[#allocation9 + $0x218] sm:$0xff]
    %v540 = vld [vmem:[#allocation9 + $0x220] sm:$0xff]
    %v541 = vld [vmem:[#allocation9 + $0x228] sm:$0xff]
    %v542 = vld [vmem:[#allocation9 + $0x230] sm:$0xff]
    %v543 = vld [vmem:[#allocation9 + $0x238] sm:$0xff]
    %v544 = vld [vmem:[#allocation9 + $0x240] sm:$0xff]
    %v545 = vld [vmem:[#allocation9 + $0x248] sm:$0xff]
    %v546 = vld [vmem:[#allocation9 + $0x250] sm:$0xff]
    %v547 = vld [vmem:[#allocation9 + $0x258] sm:$0xff]
    %v548 = vld [vmem:[#allocation9 + $0x260] sm:$0xff]
    %v549 = vld [vmem:[#allocation9 + $0x268] sm:$0xff]
    %v550 = vld [vmem:[#allocation9 + $0x270] sm:$0xff]
    %v551 = vld [vmem:[#allocation9 + $0x278] sm:$0xff]
    %v552 = vld [vmem:[#allocation9 + $0x280] sm:$0xff]
    %v553 = vld [vmem:[#allocation9 + $0x288] sm:$0xff]
    %v554 = vld [vmem:[#allocation9 + $0x290] sm:$0xff]
    %v555 = vld [vmem:[#allocation9 + $0x298] sm:$0xff]
    %v556 = vld [vmem:[#allocation9 + $0x2a0] sm:$0xff]
    %v557 = vld [vmem:[#allocation9 + $0x2a8] sm:$0xff]
    %v558 = vld [vmem:[#allocation9 + $0x2b0] sm:$0xff]
    %v559 = vld [vmem:[#allocation9 + $0x2b8] sm:$0xff]
    %v560 = vld [vmem:[#allocation9 + $0x2c0] sm:$0xff]
    %v561 = vld [vmem:[#allocation9 + $0x2c8] sm:$0xff]
    %v562 = vld [vmem:[#allocation9 + $0x2d0] sm:$0xff]
    %v563 = vld [vmem:[#allocation9 + $0x2d8] sm:$0xff]
    %v564 = vld [vmem:[#allocation9 + $0x2e0] sm:$0xff]
    %v565 = vld [vmem:[#allocation9 + $0x2e8] sm:$0xff]
    %v566 = vld [vmem:[#allocation9 + $0x2f0] sm:$0xff]
    %v567 = vld [vmem:[#allocation9 + $0x2f8] sm:$0xff]
    %v568 = vld [vmem:[#allocation9 + $0x300] sm:$0xff]
    %v569 = vld [vmem:[#allocation9 + $0x308] sm:$0xff]
    %v570 = vld [vmem:[#allocation9 + $0x310] sm:$0xff]
    %v571 = vld [vmem:[#allocation9 + $0x318] sm:$0xff]
    %v572 = vld [vmem:[#allocation9 + $0x320] sm:$0xff]
    %v573 = vld [vmem:[#allocation9 + $0x328] sm:$0xff]
    %v574 = vld [vmem:[#allocation9 + $0x330] sm:$0xff]
    %v575 = vld [vmem:[#allocation9 + $0x338] sm:$0xff]
    %v576 = vld [vmem:[#allocation9 + $0x340] sm:$0xff]
    %v577 = vld [vmem:[#allocation9 + $0x348] sm:$0xff]
    %v578 = vld [vmem:[#allocation9 + $0x350] sm:$0xff]
    %v579 = vld [vmem:[#allocation9 + $0x358] sm:$0xff]
    %v580 = vld [vmem:[#allocation9 + $0x360] sm:$0xff]
    %v581 = vld [vmem:[#allocation9 + $0x368] sm:$0xff]
    %v582 = vld [vmem:[#allocation9 + $0x370] sm:$0xff]
    %v583 = vld [vmem:[#allocation9 + $0x378] sm:$0xff]
    %v584 = vld [vmem:[#allocation9 + $0x380] sm:$0xff]
    %v585 = vld [vmem:[#allocation9 + $0x388] sm:$0xff]
    %v586 = vld [vmem:[#allocation9 + $0x390] sm:$0xff]
    %v587 = vld [vmem:[#allocation9 + $0x398] sm:$0xff]
    %v588 = vld [vmem:[#allocation9 + $0x3a0] sm:$0xff]
    %v589 = vld [vmem:[#allocation9 + $0x3a8] sm:$0xff]
    %v590 = vld [vmem:[#allocation9 + $0x3b0] sm:$0xff]
    %v591 = vld [vmem:[#allocation9 + $0x3b8] sm:$0xff]
    %v592 = vld [vmem:[#allocation9 + $0x3c0] sm:$0xff]
    %v593 = vld [vmem:[#allocation9 + $0x3c8] sm:$0xff]
    %v594 = vld [vmem:[#allocation9 + $0x3d0] sm:$0xff]
    %v595 = vld [vmem:[#allocation9 + $0x3d8] sm:$0xff]
    %v596 = vld [vmem:[#allocation9 + $0x3e0] sm:$0xff]
    %v597 = vld [vmem:[#allocation9 + $0x3e8] sm:$0xff]
    %v598 = vld [vmem:[#allocation9 + $0x3f0] sm:$0xff]
    %v599 = vld [vmem:[#allocation9 + $0x3f8] sm:$0xff]
    %v600 = vld [vmem:[%s4] sm:$0x1]
    %v602 = vlaneseq
    %v603 = vshrl.u32 %v602, 7
    %v604 = vsub.s32 0, %v603
    %v605 = vrot.slane %v600, %v604
    %607 = vmatprep.subr.mxu0 0.0
    %608 = vmatpush1.msra.mxu0 %v487
    %609 = vmatprep.subr.mxu0 0.0
    %610 = vmatpush1.msra.mxu0 %v486
    %611 = vmatprep.subr.mxu0 0.0
    %612 = vmatpush1.msra.mxu0 %v485
    %613 = vmatprep.subr.mxu0 0.0
    %614 = vmatpush1.msra.mxu0 %v484
    %615 = vmatprep.subr.mxu0 0.0
    %616 = vmatpush1.msra.mxu0 %v483
    %617 = vmatprep.subr.mxu0 0.0
    %618 = vmatpush1.msra.mxu0 %v482
    %619 = vmatprep.subr.mxu0 0.0
    %620 = vmatpush1.msra.mxu0 %v481
    %621 = vmatprep.subr.mxu0 0.0
    %622 = vmatpush1.msra.mxu0 %v480
    %623 = vmatprep.subr.mxu0 0.0
    %624 = vmatpush1.msra.mxu0 %v479
    %625 = vmatprep.subr.mxu0 0.0
    %626 = vmatpush1.msra.mxu0 %v478
    %627 = vmatprep.subr.mxu0 0.0
    %628 = vmatpush1.msra.mxu0 %v477
    %629 = vmatprep.subr.mxu0 0.0
    %630 = vmatpush1.msra.mxu0 %v476
    %631 = vmatprep.subr.mxu0 0.0
    %632 = vmatpush1.msra.mxu0 %v475
    %633 = vmatprep.subr.mxu0 0.0
    %634 = vmatpush1.msra.mxu0 %v474
    %635 = vmatprep.subr.mxu0 0.0
    %636 = vmatpush1.msra.mxu0 %v473
    %637 = vmatprep.subr.mxu0 0.0
    %638 = vmatpush1.msra.mxu0 %v472
    %639 = vmatprep.subr.mxu0 0.0
    %640 = vmatpush2.msra.mxu0 %v503
    %641 = vmatprep.subr.mxu0 0.0
    %642 = vmatpush2.msra.mxu0 %v502
    %643 = vmatprep.subr.mxu0 0.0
    %644 = vmatpush2.msra.mxu0 %v501
    %645 = vmatprep.subr.mxu0 0.0
    %646 = vmatpush2.msra.mxu0 %v500
    %647 = vmatprep.subr.mxu0 0.0
    %648 = vmatpush2.msra.mxu0 %v499
    %649 = vmatprep.subr.mxu0 0.0
    %650 = vmatpush2.msra.mxu0 %v498
    %651 = vmatprep.subr.mxu0 0.0
    %652 = vmatpush2.msra.mxu0 %v497
    %653 = vmatprep.subr.mxu0 0.0
    %654 = vmatpush2.msra.mxu0 %v496
    %655 = vmatprep.subr.mxu0 0.0
    %656 = vmatpush2.msra.mxu0 %v495
    %657 = vmatprep.subr.mxu0 0.0
    %658 = vmatpush2.msra.mxu0 %v494
    %659 = vmatprep.subr.mxu0 0.0
    %660 = vmatpush2.msra.mxu0 %v493
    %661 = vmatprep.subr.mxu0 0.0
    %662 = vmatpush2.msra.mxu0 %v492
    %663 = vmatprep.subr.mxu0 0.0
    %664 = vmatpush2.msra.mxu0 %v491
    %665 = vmatprep.subr.mxu0 0.0
    %666 = vmatpush2.msra.mxu0 %v490
    %667 = vmatprep.subr.mxu0 0.0
    %668 = vmatpush2.msra.mxu0 %v489
    %669 = vmatprep.subr.mxu0 0.0
    %670 = vmatpush2.msra.mxu0 %v488
    %671 = vmatprep.mubr.f32.mxu0 %v233
    %672 = vmatmul.mubr.f32.gmra.mxu0 %v231
    %v673 = vpop.f32.mrf.mxu0
    %v674 = vadd.f32 %v605, %v673
    %v675 = vpop.f32.mrf.mxu0
    %676 = vmatprep.mubr.f32.mxu0 %v239
    %677 = vmatmul.mubr.f32.gmra.mxu0 %v237
    %v678 = vpop.f32.mrf.mxu0
    %v679 = vadd.f32 %v605, %v678
    %v680 = vpop.f32.mrf.mxu0
    %681 = vdwg.mxu0
    %682 = vmatprep.subr.mxu0 0.0
    %683 = vmatpush1.msra.mxu0 %v519
    %684 = vmatprep.subr.mxu0 0.0
    %685 = vmatpush1.msra.mxu0 %v518
    %686 = vmatprep.subr.mxu0 0.0
    %687 = vmatpush1.msra.mxu0 %v517
    %688 = vmatprep.subr.mxu0 0.0
    %689 = vmatpush1.msra.mxu0 %v516
    %690 = vmatprep.subr.mxu0 0.0
    %691 = vmatpush1.msra.mxu0 %v515
    %692 = vmatprep.subr.mxu0 0.0
    %693 = vmatpush1.msra.mxu0 %v514
    %694 = vmatprep.subr.mxu0 0.0
    %695 = vmatpush1.msra.mxu0 %v513
    %696 = vmatprep.subr.mxu0 0.0
    %697 = vmatpush1.msra.mxu0 %v512
    %698 = vmatprep.subr.mxu0 0.0
    %699 = vmatpush1.msra.mxu0 %v511
    %700 = vmatprep.subr.mxu0 0.0
    %701 = vmatpush1.msra.mxu0 %v510
    %702 = vmatprep.subr.mxu0 0.0
    %703 = vmatpush1.msra.mxu0 %v509
    %704 = vmatprep.subr.mxu0 0.0
    %705 = vmatpush1.msra.mxu0 %v508
    %706 = vmatprep.subr.mxu0 0.0
    %707 = vmatpush1.msra.mxu0 %v507
    %708 = vmatprep.subr.mxu0 0.0
    %709 = vmatpush1.msra.mxu0 %v506
    %710 = vmatprep.subr.mxu0 0.0
    %711 = vmatpush1.msra.mxu0 %v505
    %712 = vmatprep.subr.mxu0 0.0
    %713 = vmatpush1.msra.mxu0 %v504
    %714 = vmatprep.subr.mxu0 0.0
    %715 = vmatpush2.msra.mxu0 %v535
    %716 = vmatprep.subr.mxu0 0.0
    %717 = vmatpush2.msra.mxu0 %v534
    %718 = vmatprep.subr.mxu0 0.0
    %719 = vmatpush2.msra.mxu0 %v533
    %720 = vmatprep.subr.mxu0 0.0
    %721 = vmatpush2.msra.mxu0 %v532
    %722 = vmatprep.subr.mxu0 0.0
    %723 = vmatpush2.msra.mxu0 %v531
    %724 = vmatprep.subr.mxu0 0.0
    %725 = vmatpush2.msra.mxu0 %v530
    %726 = vmatprep.subr.mxu0 0.0
    %727 = vmatpush2.msra.mxu0 %v529
    %728 = vmatprep.subr.mxu0 0.0
    %729 = vmatpush2.msra.mxu0 %v528
    %730 = vmatprep.subr.mxu0 0.0
    %731 = vmatpush2.msra.mxu0 %v527
    %732 = vmatprep.subr.mxu0 0.0
    %733 = vmatpush2.msra.mxu0 %v526
    %734 = vmatprep.subr.mxu0 0.0
    %735 = vmatpush2.msra.mxu0 %v525
    %736 = vmatprep.subr.mxu0 0.0
    %737 = vmatpush2.msra.mxu0 %v524
    %738 = vmatprep.subr.mxu0 0.0
    %739 = vmatpush2.msra.mxu0 %v523
    %740 = vmatprep.subr.mxu0 0.0
    %741 = vmatpush2.msra.mxu0 %v522
    %742 = vmatprep.subr.mxu0 0.0
    %743 = vmatpush2.msra.mxu0 %v521
    %744 = vmatprep.subr.mxu0 0.0
    %745 = vmatpush2.msra.mxu0 %v520
    %746 = vmatprep.mubr.f32.mxu0 %v310
    %747 = vmatmul.mubr.f32.gmra.mxu0 %v308
    %v748 = vpop.f32.mrf.mxu0
    %v749 = vadd.f32 %v674, %v748
    %v750 = vpop.f32.mrf.mxu0
    %751 = vmatprep.mubr.f32.mxu0 %v316
    %752 = vmatmul.mubr.f32.gmra.mxu0 %v314
    %v753 = vpop.f32.mrf.mxu0
    %v754 = vadd.f32 %v679, %v753
    %v755 = vpop.f32.mrf.mxu0
    %756 = vdwg.mxu0
    %757 = vmatprep.subr.mxu0 0.0
    %758 = vmatpush1.msra.mxu0 %v551
    %759 = vmatprep.subr.mxu0 0.0
    %760 = vmatpush1.msra.mxu0 %v550
    %761 = vmatprep.subr.mxu0 0.0
    %762 = vmatpush1.msra.mxu0 %v549
    %763 = vmatprep.subr.mxu0 0.0
    %764 = vmatpush1.msra.mxu0 %v548
    %765 = vmatprep.subr.mxu0 0.0
    %766 = vmatpush1.msra.mxu0 %v547
    %767 = vmatprep.subr.mxu0 0.0
    %768 = vmatpush1.msra.mxu0 %v546
    %769 = vmatprep.subr.mxu0 0.0
    %770 = vmatpush1.msra.mxu0 %v545
    %771 = vmatprep.subr.mxu0 0.0
    %772 = vmatpush1.msra.mxu0 %v544
    %773 = vmatprep.subr.mxu0 0.0
    %774 = vmatpush1.msra.mxu0 %v543
    %775 = vmatprep.subr.mxu0 0.0
    %776 = vmatpush1.msra.mxu0 %v542
    %777 = vmatprep.subr.mxu0 0.0
    %778 = vmatpush1.msra.mxu0 %v541
    %779 = vmatprep.subr.mxu0 0.0
    %780 = vmatpush1.msra.mxu0 %v540
    %781 = vmatprep.subr.mxu0 0.0
    %782 = vmatpush1.msra.mxu0 %v539
    %783 = vmatprep.subr.mxu0 0.0
    %784 = vmatpush1.msra.mxu0 %v538
    %785 = vmatprep.subr.mxu0 0.0
    %786 = vmatpush1.msra.mxu0 %v537
    %787 = vmatprep.subr.mxu0 0.0
    %788 = vmatpush1.msra.mxu0 %v536
    %789 = vmatprep.subr.mxu0 0.0
    %790 = vmatpush2.msra.mxu0 %v567
    %791 = vmatprep.subr.mxu0 0.0
    %792 = vmatpush2.msra.mxu0 %v566
    %793 = vmatprep.subr.mxu0 0.0
    %794 = vmatpush2.msra.mxu0 %v565
    %795 = vmatprep.subr.mxu0 0.0
    %796 = vmatpush2.msra.mxu0 %v564
    %797 = vmatprep.subr.mxu0 0.0
    %798 = vmatpush2.msra.mxu0 %v563
    %799 = vmatprep.subr.mxu0 0.0
    %800 = vmatpush2.msra.mxu0 %v562
    %801 = vmatprep.subr.mxu0 0.0
    %802 = vmatpush2.msra.mxu0 %v561
    %803 = vmatprep.subr.mxu0 0.0
    %804 = vmatpush2.msra.mxu0 %v560
    %805 = vmatprep.subr.mxu0 0.0
    %806 = vmatpush2.msra.mxu0 %v559
    %807 = vmatprep.subr.mxu0 0.0
    %808 = vmatpush2.msra.mxu0 %v558
    %809 = vmatprep.subr.mxu0 0.0
    %810 = vmatpush2.msra.mxu0 %v557
    %811 = vmatprep.subr.mxu0 0.0
    %812 = vmatpush2.msra.mxu0 %v556
    %813 = vmatprep.subr.mxu0 0.0
    %814 = vmatpush2.msra.mxu0 %v555
    %815 = vmatprep.subr.mxu0 0.0
    %816 = vmatpush2.msra.mxu0 %v554
    %817 = vmatprep.subr.mxu0 0.0
    %818 = vmatpush2.msra.mxu0 %v553
    %819 = vmatprep.subr.mxu0 0.0
    %820 = vmatpush2.msra.mxu0 %v552
    %821 = vmatprep.mubr.f32.mxu0 %v387
    %822 = vmatmul.mubr.f32.gmra.mxu0 %v385
    %v823 = vpop.f32.mrf.mxu0
    %v824 = vadd.f32 %v749, %v823
    %v825 = vpop.f32.mrf.mxu0
    %826 = vmatprep.mubr.f32.mxu0 %v393
    %827 = vmatmul.mubr.f32.gmra.mxu0 %v391
    %v828 = vpop.f32.mrf.mxu0
    %v829 = vadd.f32 %v754, %v828
    %v830 = vpop.f32.mrf.mxu0
    %831 = vdwg.mxu0
    %832 = vmatprep.subr.mxu0 0.0
    %833 = vmatpush1.msra.mxu0 %v583
    %834 = vmatprep.subr.mxu0 0.0
    %835 = vmatpush1.msra.mxu0 %v582
    %836 = vmatprep.subr.mxu0 0.0
    %837 = vmatpush1.msra.mxu0 %v581
    %838 = vmatprep.subr.mxu0 0.0
    %839 = vmatpush1.msra.mxu0 %v580
    %840 = vmatprep.subr.mxu0 0.0
    %841 = vmatpush1.msra.mxu0 %v579
    %842 = vmatprep.subr.mxu0 0.0
    %843 = vmatpush1.msra.mxu0 %v578
    %844 = vmatprep.subr.mxu0 0.0
    %845 = vmatpush1.msra.mxu0 %v577
    %846 = vmatprep.subr.mxu0 0.0
    %847 = vmatpush1.msra.mxu0 %v576
    %848 = vmatprep.subr.mxu0 0.0
    %849 = vmatpush1.msra.mxu0 %v575
    %850 = vmatprep.subr.mxu0 0.0
    %851 = vmatpush1.msra.mxu0 %v574
    %852 = vmatprep.subr.mxu0 0.0
    %853 = vmatpush1.msra.mxu0 %v573
    %854 = vmatprep.subr.mxu0 0.0
    %855 = vmatpush1.msra.mxu0 %v572
    %856 = vmatprep.subr.mxu0 0.0
    %857 = vmatpush1.msra.mxu0 %v571
    %858 = vmatprep.subr.mxu0 0.0
    %859 = vmatpush1.msra.mxu0 %v570
    %860 = vmatprep.subr.mxu0 0.0
    %861 = vmatpush1.msra.mxu0 %v569
    %862 = vmatprep.subr.mxu0 0.0
    %863 = vmatpush1.msra.mxu0 %v568
    %864 = vmatprep.subr.mxu0 0.0
    %865 = vmatpush2.msra.mxu0 %v599
    %866 = vmatprep.subr.mxu0 0.0
    %867 = vmatpush2.msra.mxu0 %v598
    %868 = vmatprep.subr.mxu0 0.0
    %869 = vmatpush2.msra.mxu0 %v597
    %870 = vmatprep.subr.mxu0 0.0
    %871 = vmatpush2.msra.mxu0 %v596
    %872 = vmatprep.subr.mxu0 0.0
    %873 = vmatpush2.msra.mxu0 %v595
    %874 = vmatprep.subr.mxu0 0.0
    %875 = vmatpush2.msra.mxu0 %v594
    %876 = vmatprep.subr.mxu0 0.0
    %877 = vmatpush2.msra.mxu0 %v593
    %878 = vmatprep.subr.mxu0 0.0
    %879 = vmatpush2.msra.mxu0 %v592
    %880 = vmatprep.subr.mxu0 0.0
    %881 = vmatpush2.msra.mxu0 %v591
    %882 = vmatprep.subr.mxu0 0.0
    %883 = vmatpush2.msra.mxu0 %v590
    %884 = vmatprep.subr.mxu0 0.0
    %885 = vmatpush2.msra.mxu0 %v589
    %886 = vmatprep.subr.mxu0 0.0
    %887 = vmatpush2.msra.mxu0 %v588
    %888 = vmatprep.subr.mxu0 0.0
    %889 = vmatpush2.msra.mxu0 %v587
    %890 = vmatprep.subr.mxu0 0.0
    %891 = vmatpush2.msra.mxu0 %v586
    %892 = vmatprep.subr.mxu0 0.0
    %893 = vmatpush2.msra.mxu0 %v585
    %894 = vmatprep.subr.mxu0 0.0
    %895 = vmatpush2.msra.mxu0 %v584
    %896 = vmatprep.mubr.f32.mxu0 %v464
    %897 = vmatmul.mubr.f32.gmra.mxu0 %v462
    %v898 = vpop.f32.mrf.mxu0
    %v899 = vadd.f32 %v824, %v898
    %v900 = vpop.f32.mrf.mxu0
    %901 = vmatprep.mubr.f32.mxu0 %v470
    %902 = vmatmul.mubr.f32.gmra.mxu0 %v468
    %v903 = vpop.f32.mrf.mxu0
    %v904 = vadd.f32 %v829, %v903
    %v905 = vpop.f32.mrf.mxu0
    %906 = vdwg.mxu0
    %v907 = vld [vmem:[%s5] sm:$0xff]
    %908 = vmatprep.subr.mxu0 0.0
    %909 = vmatpush1.xpose.msra.mxu0 0.0
    %910 = vmatprep.subr.mxu0 0.0
    %911 = vmatpush1.xpose.msra.mxu0 0.0
    %912 = vmatprep.subr.mxu0 0.0
    %913 = vmatpush1.xpose.msra.mxu0 0.0
    %914 = vmatprep.subr.mxu0 0.0
    %915 = vmatpush1.xpose.msra.mxu0 0.0
    %916 = vmatprep.subr.mxu0 0.0
    %917 = vmatpush1.xpose.msra.mxu0 0.0
    %918 = vmatprep.subr.mxu0 0.0
    %919 = vmatpush1.xpose.msra.mxu0 0.0
    %920 = vmatprep.subr.mxu0 0.0
    %921 = vmatpush1.xpose.msra.mxu0 0.0
    %922 = vmatprep.subr.mxu0 0.0
    %923 = vmatpush1.xpose.msra.mxu0 0.0
    %924 = vmatprep.subr.mxu0 0.0
    %925 = vmatpush1.xpose.msra.mxu0 0.0
    %926 = vmatprep.subr.mxu0 0.0
    %927 = vmatpush1.xpose.msra.mxu0 0.0
    %928 = vmatprep.subr.mxu0 0.0
    %929 = vmatpush1.xpose.msra.mxu0 0.0
    %930 = vmatprep.subr.mxu0 0.0
    %931 = vmatpush1.xpose.msra.mxu0 0.0
    %932 = vmatprep.subr.mxu0 0.0
    %933 = vmatpush1.xpose.msra.mxu0 0.0
    %934 = vmatprep.subr.mxu0 0.0
    %935 = vmatpush1.xpose.msra.mxu0 0.0
    %936 = vmatprep.subr.mxu0 0.0
    %937 = vmatpush1.xpose.msra.mxu0 %v904
    %938 = vmatprep.subr.mxu0 0.0
    %939 = vmatpush1.xpose.msra.mxu0 %v899
    %940 = vmatprep.subr.mxu0 0.0
    %941 = vmatpush2.xpose.msra.mxu0 0.0
    %942 = vmatprep.subr.mxu0 0.0
    %943 = vmatpush2.xpose.msra.mxu0 0.0
    %944 = vmatprep.subr.mxu0 0.0
    %945 = vmatpush2.xpose.msra.mxu0 0.0
    %946 = vmatprep.subr.mxu0 0.0
    %947 = vmatpush2.xpose.msra.mxu0 0.0
    %948 = vmatprep.subr.mxu0 0.0
    %949 = vmatpush2.xpose.msra.mxu0 0.0
    %950 = vmatprep.subr.mxu0 0.0
    %951 = vmatpush2.xpose.msra.mxu0 0.0
    %952 = vmatprep.subr.mxu0 0.0
    %953 = vmatpush2.xpose.msra.mxu0 0.0
    %954 = vmatprep.subr.mxu0 0.0
    %955 = vmatpush2.xpose.msra.mxu0 0.0
    %956 = vmatprep.subr.mxu0 0.0
    %957 = vmatpush2.xpose.msra.mxu0 0.0
    %958 = vmatprep.subr.mxu0 0.0
    %959 = vmatpush2.xpose.msra.mxu0 0.0
    %960 = vmatprep.subr.mxu0 0.0
    %961 = vmatpush2.xpose.msra.mxu0 0.0
    %962 = vmatprep.subr.mxu0 0.0
    %963 = vmatpush2.xpose.msra.mxu0 0.0
    %964 = vmatprep.subr.mxu0 0.0
    %965 = vmatpush2.xpose.msra.mxu0 0.0
    %966 = vmatprep.subr.mxu0 0.0
    %967 = vmatpush2.xpose.msra.mxu0 0.0
    %968 = vmatprep.subr.mxu0 0.0
    %969 = vmatpush2.xpose.msra.mxu0 0.0
    %970 = vmatprep.subr.mxu0 0.0
    %971 = vmatpush2.xpose.msra.mxu0 0.0
    %972 = vmatprep.mubr.f32.mxu0 0.0
    %973 = vmatmul.mubr.f32.gmra.mxu0 %v907
    %v974 = vpop.f32.mrf.mxu0
    %v975 = vadd.f32 0.0, %v974
    %v976 = vpop.f32.mrf.mxu0
    %977 = vdwg.mxu0
    %s978 = sld [smem:[#allocation2]]
    %v979 = vstv %s978
    %v980 = vadd.f32 %v975, %v979
    %vm981 = vcmask 122880
    %982 = vst.msk [vmem:[#allocation11] sm:$0x1] %vm981, %v980
    // Predicated region
    $region46: #{tpu_custom_call.1} parent=1 // pred_check
      _
    $region47: #{tpu_custom_call.1} parent=1 // pred_check_branch
      %984 = sbr.rel (0) target = $region49
    $region48: #{tpu_custom_call.1} parent=1 // pred_region
      %s986 = ssub.s32 16, 16
      %987 = vsyncadd [#allocation5], %s986
      %s989 = sshll.u32 [#allocation11], 4
      %s990 = int_to_ptr.vmem [resolvable:$true] %s989
      %992 = dma.vmem_to_hbm [thread:$0]  %s990, 16, %s7, [#allocation5]
    $region49: #{tpu_custom_call.1} parent=1 // pred_fallthru
      _
    // Predicated region
    $region50: #{tpu_custom_call.1} parent=1 // pred_check
      _
    $region51: #{tpu_custom_call.1} parent=1 // pred_check_branch
      %994 = sbr.rel (0) target = $region53
    $region52: #{tpu_custom_call.1} parent=1 // pred_region
      %995 = dma.done [#allocation5], 16
    $region53: #{tpu_custom_call.1} parent=1 // pred_fallthru
      _
    %996 = vsyncpa [#allocation4], 1
    %997 = vsyncpa [#allocation7], 1
    %998 = vsyncpa [#allocation10], 1
    %999 = vsyncpa [#allocation5], 1

</llo_original>
